<compile_context>
chip_gen: v7x
topology: tpu7x:2x2x1
jax: 0.10.0
libtpu: 0.0.40
codegen_flags: <defaults>
</compile_context>

<pallas_src>
from functools import partial

import jax
import jax.numpy as jnp
from jax.experimental import pallas as pl
from jax.experimental.pallas import tpu as pltpu


# Lane-dense layout constants.
_LANE_W = 1024     # last dim: 8 x 128 (one f32 vreg row-block), always unmasked
_TILE_R = 256      # rows per tile -> 256*1024*4 B = 1 MiB per f32 tile


def _round_up(n, m):
    return ((n + m - 1) // m) * m


def _noise_add_kernel(mean, std, x_ref, z_ref, o_ref):
    # Pure VPU elementwise add: out = x + (mean + std * z).
    # mean/std are fixed module hyper-parameters, baked in at trace time
    # (at most one compile per NoiseLayer configuration).
    x = x_ref[...].astype(jnp.float32)
    z = z_ref[...]
    o_ref[...] = (x + (jnp.float32(mean) + jnp.float32(std) * z)).astype(o_ref.dtype)


def noise_layer(x, seed, *, mean=0.0, std=0.01, training=True):
    """JAX/Pallas equivalent of NoiseLayer.forward.

    x: any-shaped array (e.g. (B, C, H, W)).  seed: python int for jax PRNG.
    """
    if not training:
        # Eval mode is a pure identity in the PyTorch module.
        return x

    orig_shape = x.shape
    n = x.size

    # Choose a lane-dense 2D layout (rows, 1024) and a row tiling that either
    # (a) divides evenly with (8,128)-aligned blocks, or (b) is a single
    # full-array block (exempt from the divisibility rule).
    if n <= _TILE_R * _LANE_W:
        n_pad = _round_up(n, _LANE_W)
        tile_r = n_pad // _LANE_W            # single block == full array dims
    else:
        n_pad = _round_up(n, _TILE_R * _LANE_W)
        tile_r = _TILE_R                     # (256, 1024): (8,128)-aligned
    rows = n_pad // _LANE_W
    grid = (rows // tile_r,)

    # Gaussian noise ~ N(0, 1), generated directly at padded length.
    key = jax.random.PRNGKey(int(seed))
    z2 = jax.random.normal(key, (n_pad,), dtype=jnp.float32).reshape(rows, _LANE_W)

    xf = x.reshape(-1)
    if n_pad != n:
        xf = jnp.pad(xf, (0, n_pad - n))
    x2 = xf.reshape(rows, _LANE_W)

    itemsize = jnp.dtype(x.dtype).itemsize
    cost = pl.CostEstimate(
        flops=2 * n_pad,
        transcendentals=0,
        bytes_accessed=n_pad * (2 * itemsize + 4),   # x in + out + f32 noise in
    )

    out2 = pl.pallas_call(
        partial(_noise_add_kernel, float(mean), float(std)),
        out_shape=jax.ShapeDtypeStruct((rows, _LANE_W), x.dtype),
        grid=grid,
        in_specs=[
            pl.BlockSpec((tile_r, _LANE_W), lambda i: (i, 0)),   # x tile
            pl.BlockSpec((tile_r, _LANE_W), lambda i: (i, 0)),   # noise tile
        ],
        out_specs=pl.BlockSpec((tile_r, _LANE_W), lambda i: (i, 0)),
        input_output_aliases={0: 0},   # out aliases (padded) x buffer
        compiler_params=pltpu.CompilerParams(
            dimension_semantics=("parallel",),
        ),
        cost_estimate=cost,
    )(x2, z2)

    return out2.reshape(-1)[:n].reshape(orig_shape)


if __name__ == "__main__":
    key = jax.random.PRNGKey(0)
    x = jax.random.normal(key, (2, 4, 16, 16), dtype=jnp.float32)

    mean, std = 0.0, 0.01

    # Training mode: out = x + noise.
    y_train = jax.block_until_ready(
        noise_layer(x, seed=1234, mean=mean, std=std, training=True)
    )
    assert y_train.shape == x.shape and y_train.dtype == x.dtype

    # Sanity: added noise should be small (std=0.01) and have roughly zero mean.
    delta = y_train - x
    assert jnp.all(jnp.isfinite(delta))
    assert float(jnp.abs(delta).max()) < 0.1            # ~10 sigma bound
    assert abs(float(delta.mean()) - mean) < 0.01

    # Eval mode: exact identity.
    y_eval = jax.block_until_ready(
        noise_layer(x, seed=1234, mean=mean, std=std, training=False)
    )
    assert bool(jnp.array_equal(y_eval, x))

    print("KERNEL_OK")
</pallas_src>

<mosaic_0001>
module attributes {stable_mosaic.version = 11 : i64} {
  func.func @_noise_add_kernel(%arg0: i32, %arg1: memref<2x1024xf32, #tpu.memory_space<vmem>>, %arg2: memref<2x1024xf32, #tpu.memory_space<vmem>>, %arg3: memref<2x1024xf32, #tpu.memory_space<vmem>>) attributes {dimension_semantics = [#tpu.dimension_semantics<parallel>], iteration_bounds = array<i64: 1>, scalar_prefetch = 0 : i64, scratch_operands = 0 : i64, tpu.core_type = #tpu.core_type<tc>, window_params = [{transform_indices = @transform_0, window_bounds = array<i64: 2, 1024>}, {transform_indices = @transform_1, window_bounds = array<i64: 2, 1024>}, {transform_indices = @transform_2, window_bounds = array<i64: 2, 1024>}]} {
    %c0 = arith.constant 0 : index
    %c0_0 = arith.constant 0 : index
    %0 = vector.load %arg1[%c0, %c0_0] : memref<2x1024xf32, #tpu.memory_space<vmem>>, vector<2x1024xf32>
    %c0_1 = arith.constant 0 : index
    %c0_2 = arith.constant 0 : index
    %1 = vector.load %arg2[%c0_1, %c0_2] : memref<2x1024xf32, #tpu.memory_space<vmem>>, vector<2x1024xf32>
    %cst = arith.constant 0.00999999977 : f32
    %2 = vector.broadcast %cst : f32 to vector<2x1024xf32>
    %3 = arith.mulf %2, %1 : vector<2x1024xf32>
    %cst_3 = arith.constant 0.000000e+00 : f32
    %4 = vector.broadcast %cst_3 : f32 to vector<2x1024xf32>
    %5 = arith.addf %4, %3 : vector<2x1024xf32>
    %6 = arith.addf %0, %5 : vector<2x1024xf32>
    %c0_4 = arith.constant 0 : index
    %c0_5 = arith.constant 0 : index
    %7 = vector.load %arg3[%c0_4, %c0_5] : memref<2x1024xf32, #tpu.memory_space<vmem>>, vector<2x1024xf32>
    tpu.vector_store %arg3[%c0_4, %c0_5], %6 {strides = array<i32>} : memref<2x1024xf32, #tpu.memory_space<vmem>>, vector<2x1024xf32>,
    return
  }
  func.func @transform_0(%arg0: i32) -> (i32, i32) {
    %c0_i32 = arith.constant 0 : i32
    %c0_i32_0 = arith.constant 0 : i32
    return %arg0, %c0_i32 : i32, i32
  }
  func.func @transform_1(%arg0: i32) -> (i32, i32) {
    %c0_i32 = arith.constant 0 : i32
    %c0_i32_0 = arith.constant 0 : i32
    return %arg0, %c0_i32 : i32, i32
  }
  func.func @transform_2(%arg0: i32) -> (i32, i32) {
    %c0_i32 = arith.constant 0 : i32
    %c0_i32_0 = arith.constant 0 : i32
    return %arg0, %c0_i32 : i32, i32
  }
}

</mosaic_0001>

<llo_original>
// kernel: tpu_custom_call.1
$region0: #{tpu_custom_call.1}
  #allocation0 [shape = 'u32[]', space=smem, size = 0x4, offset = 0x4, fixed_abs, tag = 'smem constant byte address 0x4 - core index']
  #allocation1 [shape = 'u32[144,128]{1,0:T(1,128)}', space=vmem, size = 0x12000, scoped, tag = 'internal scratch']
  %s0 = inlined_call_operand.hbm [shape: f32[2,1024], index: 0, kind: input, shape index: {}, may-alias: {0,2}]
  %s1 = inlined_call_operand.vmem [shape: f32[2,1024], index: 1, kind: input, shape index: {}]
  %s2 = inlined_call_operand.hbm [shape: f32[2,1024], index: 2, kind: output, shape index: {}, may-alias: {0,2}]
  %s3 = sld [smem:[#allocation0]]
  $region22: #{tpu_custom_call.1} parent=0
    _
  %s5 = ssub.s32 1, %s3
  %s6 = scalar_select 0, %s5, %s3
  $region1: #{tpu_custom_call.1} parent=0
    #allocation2 [shape = 'u8[8192]{0}', space=vmem, size = 0x2000, scoped, tag = 'input window, operand 0, single buffered']
    #allocation3 [shape = 's32[1]{0}', space=sflag, size = 0x4, scoped, tag = 'scoped memory for tpu_custom_call.1']
    #allocation4 [shape = 's32[1]{0}', space=sflag, size = 0x4, scoped, tag = 'scoped memory for tpu_custom_call.1']
    #allocation5 [shape = 'u8[8192]{0}', space=vmem, size = 0x2000, scoped, tag = 'output window, operand 0, single buffered']
    %7 = vsyncpa [#allocation3], 0
    %8 = vsyncpa [#allocation4], 0
    // Predicated region
    $region2: #{tpu_custom_call.1} parent=1 // pred_check
      _
    $region3: #{tpu_custom_call.1} parent=1 // pred_check_branch
      %10 = sbr.rel (0) target = $region5
    $region4: #{tpu_custom_call.1} parent=1 // pred_region
      %s12 = ssub.s32 256, 256
      %13 = vsyncadd [#allocation3], %s12
      %s15 = sshll.u32 [#allocation2], 4
      %s16 = int_to_ptr.vmem [resolvable:$true] %s15
      %18 = dma.hbm_to_vmem [thread:$0]  %s0, 256, %s16, [#allocation3]
    $region5: #{tpu_custom_call.1} parent=1 // pred_fallthru
      _
    // Predicated region
    $region6: #{tpu_custom_call.1} parent=1 // pred_check
      _
    $region7: #{tpu_custom_call.1} parent=1 // pred_check_branch
      %20 = sbr.rel (0) target = $region9
    $region8: #{tpu_custom_call.1} parent=1 // pred_region
      _
    $region9: #{tpu_custom_call.1} parent=1 // pred_fallthru
      _
    // Predicated region
    $region10: #{tpu_custom_call.1} parent=1 // pred_check
      _
    $region11: #{tpu_custom_call.1} parent=1 // pred_check_branch
      %22 = sbr.rel (0) target = $region13
    $region12: #{tpu_custom_call.1} parent=1 // pred_region
      %23 = dma.done [#allocation3], 256
    $region13: #{tpu_custom_call.1} parent=1 // pred_fallthru
      _
    %v24 = vld [vmem:[#allocation2] sm:$0xff]
    %v25 = vld [vmem:[#allocation2 + $0x8] sm:$0xff]
    %v26 = vld [vmem:[%s1] sm:$0xff]
    %v27 = vld [vmem:[%s1 + $0x8] sm:$0xff]
    %v28 = vmul.f32 %v26, 0.01
    %v29 = vmul.f32 %v27, 0.01
    %v30 = vadd.f32 %v28, 0.0
    %v31 = vadd.f32 %v29, 0.0
    %v32 = vadd.f32 %v24, %v30
    %v33 = vadd.f32 %v25, %v31
    %34 = vst [vmem:[#allocation5] sm:$0xff] %v32
    %35 = vst [vmem:[#allocation5 + $0x8] sm:$0xff] %v33
    // Predicated region
    $region14: #{tpu_custom_call.1} parent=1 // pred_check
      _
    $region15: #{tpu_custom_call.1} parent=1 // pred_check_branch
      %37 = sbr.rel (0) target = $region17
    $region16: #{tpu_custom_call.1} parent=1 // pred_region
      %s39 = ssub.s32 256, 256
      %40 = vsyncadd [#allocation4], %s39
      %s42 = sshll.u32 [#allocation5], 4
      %s43 = int_to_ptr.vmem [resolvable:$true] %s42
      %45 = dma.vmem_to_hbm [thread:$0]  %s43, 256, %s2, [#allocation4]
    $region17: #{tpu_custom_call.1} parent=1 // pred_fallthru
      _
    // Predicated region
    $region18: #{tpu_custom_call.1} parent=1 // pred_check
      _
    $region19: #{tpu_custom_call.1} parent=1 // pred_check_branch
      %47 = sbr.rel (0) target = $region21
    $region20: #{tpu_custom_call.1} parent=1 // pred_region
      %48 = dma.done [#allocation4], 256
    $region21: #{tpu_custom_call.1} parent=1 // pred_fallthru
      _
    %49 = vsyncpa [#allocation3], 1
    %50 = vsyncpa [#allocation4], 1

</llo_original>
